<compile_context>
chip_gen: v7x
topology: tpu7x:2x2x1
jax: 0.10.0
libtpu: 0.0.40
codegen_flags: <defaults>
</compile_context>

<pallas_src>
import math

import jax
import jax.numpy as jnp
from jax.experimental import pallas as pl
from jax.experimental.pallas import tpu as pltpu


def _round_up(x, m):
    return ((x + m - 1) // m) * m


# ---------------------------------------------------------------------------
# Fused kernel: per-image phase-unfolded strided conv
# ---------------------------------------------------------------------------
def _make_fused_kernel(qh, row_shift, m_rows):
    def kernel(x_ref, w_ref, o_ref):
        # x_ref: (Rx, Kq) bf16 slab for one image; w_ref: (Qh, Kq, tn) bf16
        acc = jnp.dot(x_ref[pl.ds(0, m_rows), :], w_ref[0],
                      preferred_element_type=jnp.float32)
        for a in range(1, qh):
            acc = acc + jnp.dot(x_ref[pl.ds(a * row_shift, m_rows), :], w_ref[a],
                                preferred_element_type=jnp.float32)
        o_ref[...] = acc.astype(o_ref.dtype)
    return kernel


def _fused_conv(xflat, wq, m_rows, row_shift, tn, vmem_limit):
    n, rx, kq = xflat.shape
    qh, _, cout_pad = wq.shape
    cout_tiles = cout_pad // tn
    kernel = _make_fused_kernel(qh, row_shift, m_rows)

    flops = 2 * n * m_rows * kq * qh * cout_pad
    bytes_accessed = (xflat.size * 2 * cout_tiles + wq.size * 2
                      + n * m_rows * cout_pad * 4)

    return pl.pallas_call(
        kernel,
        out_shape=jax.ShapeDtypeStruct((n, m_rows, cout_pad), jnp.float32),
        grid_spec=pltpu.PrefetchScalarGridSpec(
            num_scalar_prefetch=0,
            grid=(cout_tiles, n),                  # batch axis fastest
            in_specs=[
                # per-image activation slab, streamed once
                pl.BlockSpec((None, rx, kq), lambda j, b: (b, 0, 0)),
                # weights: block index constant along the fast axis -> resident
                pl.BlockSpec((qh, kq, tn), lambda j, b: (0, 0, j)),
            ],
            out_specs=pl.BlockSpec((None, m_rows, tn), lambda j, b: (b, 0, j)),
        ),
        compiler_params=pltpu.CompilerParams(
            dimension_semantics=("parallel", "parallel"),
            vmem_limit_bytes=vmem_limit,
        ),
        cost_estimate=pl.CostEstimate(
            flops=flops, transcendentals=0, bytes_accessed=bytes_accessed),
    )(xflat, wq)


# ---------------------------------------------------------------------------
# Fallback: improved tiled im2col matmul (for slabs too big for VMEM)
# ---------------------------------------------------------------------------
def _mm_single_kernel(a_ref, b_ref, o_ref):
    # Single-K specialization: no acc scratch, no pl.when.
    o_ref[...] = jnp.dot(a_ref[...], b_ref[...],
                         preferred_element_type=jnp.float32).astype(o_ref.dtype)


def _mm_tiled_kernel(a_ref, b_ref, o_ref, acc_ref):
    k = pl.program_id(2)

    @pl.when(k == 0)
    def _():
        acc_ref[...] = jnp.zeros_like(acc_ref)

    acc_ref[...] += jnp.dot(a_ref[...], b_ref[...],
                            preferred_element_type=jnp.float32)

    @pl.when(k == pl.num_programs(2) - 1)
    def _():
        o_ref[...] = acc_ref[...].astype(o_ref.dtype)


def _choose_tm(m_rows):
    m8 = _round_up(m_rows, 8)
    if m8 <= 256:
        return m8                       # single small tile
    if m8 <= 1024:
        return _round_up((m8 + 1) // 2, 8)   # two tiles -> both v7x TCs busy
    # large M: 256-aligned tile minimizing padding waste (prefer larger on tie)
    best_tm, best_pad = 256, _round_up(m8, 256)
    for tm in (512, 768, 1024):
        pad = _round_up(m8, tm)
        if pad <= best_pad:
            best_tm, best_pad = tm, pad
    return best_tm


def _im2col_matmul(a, b, vmem_cap=40 * 2**20):
    """a: (M, Kc) bf16, b: (Kc, Cout) bf16 -> (M_pad, Cout_pad) f32."""
    m_rows, kc = a.shape
    _, cout = b.shape

    cout_pad = _round_up(cout, 128)
    tn = cout_pad if cout_pad <= 1024 else 512
    cout_pad = _round_up(cout_pad, tn)

    tm = _choose_tm(m_rows)
    m_pad = _round_up(_round_up(m_rows, 8), tm)

    single_k = kc <= 2048
    if single_k:
        kc_pad, tk = kc, kc              # full-extent K block: no 128 padding
    else:
        tk = 512
        kc_pad = _round_up(kc, tk)

    a = jnp.pad(a, ((0, m_pad - m_rows), (0, kc_pad - kc)))
    b = jnp.pad(b, ((0, kc_pad - kc), (0, cout_pad - cout)))

    est = 2 * (tm * tk * 2 + tk * tn * 2 + tm * tn * 4) + tm * tn * 4 + (2 << 20)
    vmem_limit = int(min(vmem_cap, max(32 * 2**20, est)))

    flops = 2 * m_pad * kc_pad * cout_pad
    bytes_accessed = (a.size * 2 * (cout_pad // tn)
                      + b.size * 2 * (m_pad // tm) + m_pad * cout_pad * 4)
    common = dict(
        out_shape=jax.ShapeDtypeStruct((m_pad, cout_pad), jnp.float32),
        cost_estimate=pl.CostEstimate(flops=flops, transcendentals=0,
                                      bytes_accessed=bytes_accessed),
    )

    if single_k:
        return pl.pallas_call(
            _mm_single_kernel,
            grid_spec=pltpu.PrefetchScalarGridSpec(
                num_scalar_prefetch=0,
                grid=(cout_pad // tn, m_pad // tm),     # M axis fastest
                in_specs=[
                    pl.BlockSpec((tm, kc_pad), lambda j, i: (i, 0)),
                    # constant along fast axis -> B stays VMEM-resident
                    pl.BlockSpec((kc_pad, tn), lambda j, i: (0, j)),
                ],
                out_specs=pl.BlockSpec((tm, tn), lambda j, i: (i, j)),
            ),
            compiler_params=pltpu.CompilerParams(
                dimension_semantics=("parallel", "parallel"),
                vmem_limit_bytes=vmem_limit,
            ),
            **common,
        )(a, b)

    return pl.pallas_call(
        _mm_tiled_kernel,
        grid_spec=pltpu.PrefetchScalarGridSpec(
            num_scalar_prefetch=0,
            grid=(cout_pad // tn, m_pad // tm, kc_pad // tk),
            in_specs=[
                pl.BlockSpec((tm, tk), lambda j, i, k: (i, k)),
                pl.BlockSpec((tk, tn), lambda j, i, k: (k, j)),
            ],
            out_specs=pl.BlockSpec((tm, tn), lambda j, i, k: (i, j)),
            scratch_shapes=[pltpu.VMEM((tm, tn), jnp.float32)],
        ),
        compiler_params=pltpu.CompilerParams(
            dimension_semantics=("parallel", "parallel", "arbitrary"),
            vmem_limit_bytes=vmem_limit,
        ),
        **common,
    )(a, b)


# ---------------------------------------------------------------------------
# Module wrapper
# ---------------------------------------------------------------------------
class SConv2dStridePallas:
    """JAX/Pallas port of models/stoch.py::SConv2dStride (stoch=True branch).

    forward: draw selh, selw ~ U{0..stride-1}, crop x[:, :, selh:, selw:] and
    apply the strided conv.  ceil_mode only matters on the dead stoch=False
    branch and is intentionally unused.
    """

    _FUSED_VMEM_BUDGET = 36 * 2**20     # fused path if its footprint fits
    _VMEM_CAP = 40 * 2**20              # headroom for v7x (64 MiB phys / TC)

    def __init__(self, in_channels, out_channels, kernel_size, stride=1,
                 padding=0, dilation=1, groups=1, ceil_mode=True, bias=False,
                 key=None):
        assert groups == 1, "groups != 1 not supported"
        assert not bias, "module default is bias=False"

        def _pair(v):
            return (v, v) if isinstance(v, int) else tuple(v)

        self.in_channels = in_channels
        self.out_channels = out_channels
        self.kernel_size = _pair(kernel_size)
        self.stride = _pair(stride)
        self.padding = _pair(padding)
        self.dilation = _pair(dilation)
        self.ceil_mode = ceil_mode

        if key is None:
            key = jax.random.PRNGKey(0)
        kh, kw = self.kernel_size
        fan_in = in_channels * kh * kw
        bound = 1.0 / math.sqrt(fan_in)      # kaiming_uniform(a=sqrt(5)) bound
        # PyTorch Conv2d weight layout: (Cout, Cin, KH, KW)
        self.weight = jax.random.uniform(
            key, (out_channels, in_channels, kh, kw),
            minval=-bound, maxval=bound, dtype=jnp.float32)

    @staticmethod
    def sel_offsets(key, stride_hw):
        """torch.randint(stride, (1,)) equivalent for (selh, selw).

        Returns Python ints because the crop changes the static spatial extent
        (exactly as in the PyTorch module); at most stride_h*stride_w traces.
        # TODO(synk): cache per-offset jitted traces / accept precomputed sel.
        """
        kh_key, kw_key = jax.random.split(key)
        selh = int(jax.random.randint(kh_key, (), 0, stride_hw[0]))
        selw = int(jax.random.randint(kw_key, (), 0, stride_hw[1]))
        return selh, selw

    # -- fused phase-unfolded path --------------------------------------
    def _fused_forward(self, x_nhwc, n, c, hc, oh, ow, owp, qh, kq, m_rows,
                       rx, tn, cout_pad, vmem_est):
        sh, sw = self.stride
        kh, kw = self.kernel_size
        dh, dw = self.dilation
        cout = self.out_channels

        # W-direction unfold (kw strided column gathers; ~kw/stride_w x input
        # bytes of glue).  H-direction taps are fused inside the kernel.
        cols = []
        for iw in range(kw):
            start = iw * dw
            cols.append(x_nhwc[:, :, start:start + (ow - 1) * sw + 1:sw, :])
        xu = jnp.stack(cols, axis=3)                    # (N, Hc, OW, kw, C)

        target_h = (oh + qh - 1) * sh
        if hc < target_h:
            xu = jnp.pad(xu, ((0, 0), (0, target_h - hc), (0, 0), (0, 0), (0, 0)))
        elif hc > target_h:
            xu = xu[:, :target_h]
        if ow < owp:
            xu = jnp.pad(xu, ((0, 0), (0, 0), (0, owp - ow), (0, 0), (0, 0)))

        xu = xu.reshape(n, oh + qh - 1, sh, owp, kw, c)
        xu = jnp.transpose(xu, (0, 1, 3, 2, 4, 5))      # (N, Hq, OWp, s, kw, C)
        xflat = xu.reshape(n, rx, kq)                   # (N, (OH+Qh-1)*OWp, Kq)

        # Per-tap weights Wq[a][(r, iw, c), co] = W[co, c, ih, iw], ih*dh = a*sh + r
        wq = jnp.zeros((qh, sh, kw, c, cout), jnp.float32)
        for ih in range(kh):
            pos = ih * dh
            a, r = pos // sh, pos % sh
            wq = wq.at[a, r].set(jnp.transpose(self.weight[:, :, ih, :], (2, 1, 0)))
        wq = wq.reshape(qh, kq, cout).astype(jnp.bfloat16)
        wq = jnp.pad(wq, ((0, 0), (0, 0), (0, cout_pad - cout)))

        vmem_limit = int(min(self._VMEM_CAP, max(32 * 2**20, vmem_est)))
        return _fused_conv(xflat, wq, m_rows, owp, tn, vmem_limit)

    # -- fallback im2col path --------------------------------------------
    def _im2col_forward(self, x_nhwc, n, c, oh, ow):
        sh, sw = self.stride
        kh, kw = self.kernel_size
        dh, dw = self.dilation
        cout = self.out_channels

        cols = []
        for ih in range(kh):
            for iw in range(kw):
                h0, w0 = ih * dh, iw * dw
                cols.append(x_nhwc[:, h0:h0 + (oh - 1) * sh + 1:sh,
                                   w0:w0 + (ow - 1) * sw + 1:sw, :])
        a = jnp.stack(cols, axis=3).reshape(n * oh * ow, kh * kw * c)

        b = jnp.transpose(self.weight, (2, 3, 1, 0)).reshape(kh * kw * c, cout)
        return _im2col_matmul(a, b.astype(jnp.bfloat16), vmem_cap=self._VMEM_CAP)

    # -- forward ----------------------------------------------------------
    def __call__(self, x, key=None, sel=None):
        n, c, _, _ = x.shape
        assert c == self.in_channels
        sh, sw = self.stride
        kh, kw = self.kernel_size
        dh, dw = self.dilation
        ph, pw = self.padding

        if sel is None:
            if key is None:
                key = jax.random.PRNGKey(0)
            selh, selw = self.sel_offsets(key, (sh, sw))
        else:
            selh, selw = sel

        xc = x[:, :, selh:, selw:]
        if ph or pw:
            xc = jnp.pad(xc, ((0, 0), (0, 0), (ph, ph), (pw, pw)))
        # bf16 activations/weights, f32 accumulation (intentional MXU trade).
        xc = xc.astype(jnp.bfloat16)
        x_nhwc = jnp.transpose(xc, (0, 2, 3, 1))        # (N, Hc, Wc, Cin)
        hc, wc = x_nhwc.shape[1], x_nhwc.shape[2]

        kh_eff = dh * (kh - 1) + 1
        kw_eff = dw * (kw - 1) + 1
        assert hc >= kh_eff and wc >= kw_eff, "input too small after crop"
        oh = (hc - kh_eff) // sh + 1
        ow = (wc - kw_eff) // sw + 1

        cout = self.out_channels
        cout_pad = _round_up(cout, 128)
        tn = cout_pad if cout_pad <= 1024 else 512
        cout_pad = _round_up(cout_pad, tn)

        # Fused-path sizing + VMEM footprint (double buffers + temporaries).
        owp = _round_up(ow, 8)
        qh = (dh * (kh - 1)) // sh + 1
        kq = sh * kw * c
        m_rows = oh * owp
        rx = (oh + qh - 1) * owp
        est = (2 * rx * kq * 2 + 2 * qh * kq * tn * 2 + 2 * m_rows * tn * 4
               + m_rows * tn * 4 + m_rows * kq * 2 + (2 << 20))

        if est <= self._FUSED_VMEM_BUDGET:
            out_flat = self._fused_forward(x_nhwc, n, c, hc, oh, ow, owp, qh,
                                           kq, m_rows, rx, tn, cout_pad, est)
            out = out_flat[:, :, :cout].reshape(n, oh, owp, cout)[:, :, :ow, :]
        else:
            out_rows = self._im2col_forward(x_nhwc, n, c, oh, ow)
            out = out_rows[:n * oh * ow, :cout].reshape(n, oh, ow, cout)

        # Module semantics: NCHW f32 output.
        return jnp.transpose(out, (0, 3, 1, 2)).astype(jnp.float32)


if __name__ == "__main__":
    key = jax.random.PRNGKey(0)
    k_x, k_w, k_sel = jax.random.split(key, 3)

    # small shapes consistent with the module: N=2, Cin=4, H=W=16, Cout=8, K=3, s=2
    n, cin, h, w = 2, 4, 16, 16
    cout, ksize, stride = 8, 3, 2
    x = jax.random.normal(k_x, (n, cin, h, w), dtype=jnp.float32)

    mod = SConv2dStridePallas(cin, cout, ksize, stride=stride, padding=0, key=k_w)
    out = mod(x, key=k_sel)
    out = jax.block_until_ready(out)

    # Reference: XLA conv on the identically cropped, bf16-rounded input.
    selh, selw = SConv2dStridePallas.sel_offsets(k_sel, (stride, stride))
    xc_ref = x[:, :, selh:, selw:].astype(jnp.bfloat16).astype(jnp.float32)
    w_ref = mod.weight.astype(jnp.bfloat16).astype(jnp.float32)
    ref = jax.lax.conv_general_dilated(
        xc_ref, w_ref, window_strides=(stride, stride), padding="VALID",
        dimension_numbers=("NCHW", "OIHW", "NCHW"))
    assert out.shape == ref.shape, (out.shape, ref.shape)
    assert jnp.allclose(out, ref, atol=2e-3, rtol=2e-3), \
        float(jnp.max(jnp.abs(out - ref)))

    print("KERNEL_OK")
</pallas_src>

<mosaic_0001>
module attributes {stable_mosaic.version = 11 : i64} {
  func.func @kernel(%arg0: i32, %arg1: i32, %arg2: memref<1x64x24xbf16, #tpu.memory_space<vmem>>, %arg3: memref<2x24x128xbf16, #tpu.memory_space<vmem>>, %arg4: memref<1x56x128xf32, #tpu.memory_space<vmem>>) attributes {dimension_semantics = [#tpu.dimension_semantics<parallel>, #tpu.dimension_semantics<parallel>], iteration_bounds = array<i64: 1, 2>, scalar_prefetch = 0 : i64, scratch_operands = 0 : i64, tpu.core_type = #tpu.core_type<tc>, window_params = [{transform_indices = @transform_0, window_bounds = array<i64: 1, 64, 24>}, {transform_indices = @transform_1, window_bounds = array<i64: 2, 24, 128>}, {transform_indices = @transform_2, window_bounds = array<i64: 1, 56, 128>}]} {
    %c0 = arith.constant 0 : index
    %c0_0 = arith.constant 0 : index
    %c0_1 = arith.constant 0 : index
    %0 = vector.load %arg2[%c0, %c0_0, %c0_1] : memref<1x64x24xbf16, #tpu.memory_space<vmem>>, vector<1x56x24xbf16>
    %1 = vector.shape_cast %0 : vector<1x56x24xbf16> to vector<56x24xbf16>
    %c0_2 = arith.constant 0 : index
    %c0_3 = arith.constant 0 : index
    %c0_4 = arith.constant 0 : index
    %2 = vector.load %arg3[%c0_2, %c0_3, %c0_4] : memref<2x24x128xbf16, #tpu.memory_space<vmem>>, vector<1x24x128xbf16>
    %3 = vector.shape_cast %2 : vector<1x24x128xbf16> to vector<24x128xbf16>
    %cst = arith.constant dense<0.000000e+00> : vector<56x128xf32>
    %4 = tpu.matmul %1, %3, %cst {dimension_numbers = #tpu.dot_dimension_numbers<[1], [0], [0], [1], [0, 0, 1, 1], [], []>} : vector<56x24xbf16>, vector<24x128xbf16>, vector<56x128xf32> -> vector<56x128xf32>
    %c0_5 = arith.constant 0 : index
    %c8 = arith.constant 8 : index
    %c0_6 = arith.constant 0 : index
    %5 = vector.load %arg2[%c0_5, %c8, %c0_6] : memref<1x64x24xbf16, #tpu.memory_space<vmem>>, vector<1x56x24xbf16>
    %6 = vector.shape_cast %5 : vector<1x56x24xbf16> to vector<56x24xbf16>
    %c1 = arith.constant 1 : index
    %c0_7 = arith.constant 0 : index
    %c0_8 = arith.constant 0 : index
    %7 = vector.load %arg3[%c1, %c0_7, %c0_8] : memref<2x24x128xbf16, #tpu.memory_space<vmem>>, vector<1x24x128xbf16>
    %8 = vector.shape_cast %7 : vector<1x24x128xbf16> to vector<24x128xbf16>
    %cst_9 = arith.constant dense<0.000000e+00> : vector<56x128xf32>
    %9 = tpu.matmul %6, %8, %cst_9 {dimension_numbers = #tpu.dot_dimension_numbers<[1], [0], [0], [1], [0, 0, 1, 1], [], []>} : vector<56x24xbf16>, vector<24x128xbf16>, vector<56x128xf32> -> vector<56x128xf32>
    %10 = arith.addf %4, %9 : vector<56x128xf32>
    %c0_10 = arith.constant 0 : index
    %c0_11 = arith.constant 0 : index
    %c0_12 = arith.constant 0 : index
    %11 = vector.load %arg4[%c0_10, %c0_11, %c0_12] : memref<1x56x128xf32, #tpu.memory_space<vmem>>, vector<1x56x128xf32>
    %12 = vector.shape_cast %11 : vector<1x56x128xf32> to vector<56x128xf32>
    %13 = vector.shape_cast %10 : vector<56x128xf32> to vector<1x56x128xf32>
    tpu.vector_store %arg4[%c0_10, %c0_11, %c0_12], %13 {strides = array<i32>} : memref<1x56x128xf32, #tpu.memory_space<vmem>>, vector<1x56x128xf32>,
    return
  }
  func.func @transform_0(%arg0: i32, %arg1: i32) -> (i32, i32, i32) {
    %c0_i32 = arith.constant 0 : i32
    %c0_i32_0 = arith.constant 0 : i32
    %c0_i32_1 = arith.constant 0 : i32
    return %arg1, %c0_i32, %c0_i32_0 : i32, i32, i32
  }
  func.func @transform_1(%arg0: i32, %arg1: i32) -> (i32, i32, i32) {
    %c0_i32 = arith.constant 0 : i32
    %c0_i32_0 = arith.constant 0 : i32
    %c0_i32_1 = arith.constant 0 : i32
    return %c0_i32, %c0_i32_0, %arg0 : i32, i32, i32
  }
  func.func @transform_2(%arg0: i32, %arg1: i32) -> (i32, i32, i32) {
    %c0_i32 = arith.constant 0 : i32
    %c0_i32_0 = arith.constant 0 : i32
    return %arg1, %c0_i32, %arg0 : i32, i32, i32
  }
}

</mosaic_0001>

<llo_original>
// kernel: tpu_custom_call.1
$region0: #{tpu_custom_call.1}
  #allocation0 [shape = 'u32[]', space=smem, size = 0x4, offset = 0x4, fixed_abs, tag = 'smem constant byte address 0x4 - core index']
  #allocation1 [shape = 'u32[144,128]{1,0:T(1,128)}', space=vmem, size = 0x12000, scoped, tag = 'internal scratch']
  %s0 = inlined_call_operand.vmem [shape: bf16[2,64,24], index: 0, kind: input, shape index: {}]
  %s1 = inlined_call_operand.vmem [shape: bf16[2,24,128], index: 1, kind: input, shape index: {}]
  %s2 = inlined_call_operand.hbm [shape: f32[2,56,128], index: 2, kind: output, shape index: {}]
  %s3 = sld [smem:[#allocation0]]
  $region41: #{tpu_custom_call.1} parent=0
    _
  %s5 = ssub.s32 1, %s3
  %s6 = scalar_select 0, %s5, %s3
  $region1: #{tpu_custom_call.1} parent=0
    #allocation2 [shape = 'u8[57344]{0}', space=vmem, size = 0xe000, scoped, tag = 'output window, operand 0']
    #allocation3 [shape = 's32[2]{0}', space=sflag, size = 0x8, scoped, tag = 'scoped memory for tpu_custom_call.1']
    %7 = vsyncpa [#allocation3], 0
    %s8 = scalar_lea.sflag [#allocation3], 1
    %9 = vsyncpa %s8, 0
    loop: start=0, step=1, limit=4
    $region2: #{tpu_custom_call.1} parent=1 // loop_pre_header
      _
    $region3: #{tpu_custom_call.1} parent=1 // loop_header
      %s11 = sphi 0, %s15
      %p12 = scmp.ge.s32.totalorder %s11, 4
      %s18 = sphi 0, %s30
      %s19 = sphi 0, %s26
      %s20 = sphi 0, %s18
      %s21 = sphi 0, %s19
      %s22 = sphi 0, %s20
      %s23 = sphi 0, %s21
      %s33 = sphi 0, %s35
      %s36 = sphi 0, %s33
      %s37 = sphi 0, %s36
      %s53 = sphi 0, %s37
      %s59 = sphi 0, %s61
      %s62 = sphi 0, %s59
      %s63 = sphi 0, %s62
      %s79 = sphi 0, %s63
      %s87 = sphi 0, %s89
      %s90 = sphi 0, %s87
      %s91 = sphi 0, %s90
      %s107 = sphi 0, %s91
    $region4: #{tpu_custom_call.1} parent=1 // loop_header_branch
      %14 = sbr.rel (%p12) target = $region8
    $region5: #{tpu_custom_call.1} parent=1 // loop_body
      %s16 = ssub.s32 %s11, 1
      %s17 = ssub.s32 %s11, 2
      %s24 = sadd.s32 1, %s19
      %p25 = scmp.ge.s32.totalorder %s24, 2
      %s26 = scalar_select %p25, 0, %s24
      %s27 = sadd.s32 1, %s18
      %s28 = scalar_select %p25, %s27, %s18
      %p29 = scmp.ge.s32.totalorder %s28, 1
      %s30 = scalar_select %p29, 0, %s28
      %s31 = ssub.s32 %s19, %s26
      %p32 = scmp.eq.s32.totalorder %s31, 0
      %s34 = sadd.s32 %s33, 1
      %s35 = scalar_select %p32, %s33, %s34
      %p38 = pneg %p32
      %p39 = scmp.eq.s32.totalorder %s11, 1
      %p40 = por %p38, %p39
      %p41 = scmp.ne.s32.totalorder %s33, %s36
      %p42 = scmp.eq.s32.totalorder %s11, 0
      %p43 = por %p41, %p42
      %p44 = scmp.ne.s32.totalorder %s33, %s36
      %p45 = scmp.eq.s32.totalorder %s16, 1
      %p46 = por %p44, %p45
      %p47 = scmp.ne.s32.totalorder %s36, %s37
      %p48 = scmp.eq.s32.totalorder %s16, 0
      %p49 = por %p47, %p48
      %p50 = scmp.ne.s32.totalorder %s36, %s37
      %p51 = scmp.eq.s32.totalorder %s17, 1
      %p52 = por %p50, %p51
      %p54 = scmp.ne.s32.totalorder %s37, %s53
      %p55 = scmp.eq.s32.totalorder %s17, 0
      %p56 = por %p54, %p55
      %s57 = ssub.s32 %s18, %s30
      %p58 = scmp.eq.s32.totalorder %s57, 0
      %s60 = sadd.s32 %s59, 1
      %s61 = scalar_select %p58, %s59, %s60
      %p64 = pneg %p58
      %p65 = scmp.eq.s32.totalorder %s11, 1
      %p66 = por %p64, %p65
      %p67 = scmp.ne.s32.totalorder %s59, %s62
      %p68 = scmp.eq.s32.totalorder %s11, 0
      %p69 = por %p67, %p68
      %p70 = scmp.ne.s32.totalorder %s59, %s62
      %p71 = scmp.eq.s32.totalorder %s16, 1
      %p72 = por %p70, %p71
      %p73 = scmp.ne.s32.totalorder %s62, %s63
      %p74 = scmp.eq.s32.totalorder %s16, 0
      %p75 = por %p73, %p74
      %p76 = scmp.ne.s32.totalorder %s62, %s63
      %p77 = scmp.eq.s32.totalorder %s17, 1
      %p78 = por %p76, %p77
      %p80 = scmp.ne.s32.totalorder %s63, %s79
      %p81 = scmp.eq.s32.totalorder %s17, 0
      %p82 = por %p80, %p81
      %s83 = ssub.s32 %s19, %s26
      %s84 = ssub.s32 %s18, %s30
      %s85 = sor.u32 %s83, %s84
      %p86 = scmp.eq.s32.totalorder %s85, 0
      %s88 = sadd.s32 %s87, 1
      %s89 = scalar_select %p86, %s87, %s88
      %p92 = pneg %p86
      %p93 = scmp.eq.s32.totalorder %s11, 1
      %p94 = por %p92, %p93
      %p95 = scmp.ne.s32.totalorder %s87, %s90
      %p96 = scmp.eq.s32.totalorder %s11, 0
      %p97 = por %p95, %p96
      %p98 = scmp.ne.s32.totalorder %s87, %s90
      %p99 = scmp.eq.s32.totalorder %s16, 1
      %p100 = por %p98, %p99
      %p101 = scmp.ne.s32.totalorder %s90, %s91
      %p102 = scmp.eq.s32.totalorder %s16, 0
      %p103 = por %p101, %p102
      %p104 = scmp.ne.s32.totalorder %s90, %s91
      %p105 = scmp.eq.s32.totalorder %s17, 1
      %p106 = por %p104, %p105
      %p108 = scmp.ne.s32.totalorder %s91, %s107
      %p109 = scmp.eq.s32.totalorder %s17, 0
      %p110 = por %p108, %p109
      %p111 = scmp.le.s32.totalorder 1, %s11
      %p112 = scmp.lt.s32.totalorder %s11, 3
      %p113 = pnand %p111, %p112
      %p114 = pneg %p113
      // Predicated region
      $region9: #{tpu_custom_call.1} parent=5 // pred_check
        _
      $region10: #{tpu_custom_call.1} parent=5 // pred_check_branch
        %116 = sbr.rel (%p113) target = $region12
      $region11: #{tpu_custom_call.1} parent=5 // pred_region
        %s117 = ssub.s32 %s11, 1
        // Predicated region
        $region13: #{tpu_custom_call.1} parent=11 // pred_check
          %p118 = pneg %p75
        $region14: #{tpu_custom_call.1} parent=11 // pred_check_branch
          %120 = sbr.rel (%p118) target = $region16
        $region15: #{tpu_custom_call.1} parent=11 // pred_region
          %p121 = scmp.lt.s32.totalorder %s20, 0
          %s122 = scalar_select %p121, %s20, 0
          %s123 = smul.addr %s122, 4
          %s124 = scalar_lea.vmem %s1, %s123
        $region16: #{tpu_custom_call.1} parent=11 // pred_fallthru
          _
      $region12: #{tpu_custom_call.1} parent=5 // pred_fallthru
        _
      %p125 = scmp.lt.s32.totalorder %s11, 2
      // Predicated region
      $region17: #{tpu_custom_call.1} parent=5 // pred_check
        %p126 = pneg %p125
      $region18: #{tpu_custom_call.1} parent=5 // pred_check_branch
        %128 = sbr.rel (%p126) target = $region20
      $region19: #{tpu_custom_call.1} parent=5 // pred_region
        // Predicated region
        $region21: #{tpu_custom_call.1} parent=19 // pred_check
          %p129 = pneg %p43
        $region22: #{tpu_custom_call.1} parent=19 // pred_check_branch
          %131 = sbr.rel (%p129) target = $region24
        $region23: #{tpu_custom_call.1} parent=19 // pred_region
          %p132 = scmp.lt.s32.totalorder %s19, 1
          %s133 = scalar_select %p132, %s19, 1
          %s134 = smul.addr %s133, 8
          %s135 = smul.addr %s134, 4
          %s136 = scalar_lea.vmem %s0, %s135
        $region24: #{tpu_custom_call.1} parent=19 // pred_fallthru
          _
      $region20: #{tpu_custom_call.1} parent=5 // pred_fallthru
        _
      %p137 = scmp.le.s32.totalorder 1, %s11
      %p138 = scmp.lt.s32.totalorder %s11, 3
      %p139 = pnand %p137, %p138
      %p140 = pneg %p139
      // Predicated region
      $region25: #{tpu_custom_call.1} parent=5 // pred_check
        _
      $region26: #{tpu_custom_call.1} parent=5 // pred_check_branch
        %142 = sbr.rel (%p139) target = $region28
      $region27: #{tpu_custom_call.1} parent=5 // pred_region
        %s143 = ssub.s32 %s11, 1
        %p144 = scmp.lt.s32.totalorder %s21, 1
        %s145 = scalar_select %p144, %s21, 1
        %s146 = smul.addr %s145, 8
        %s147 = smul.addr %s146, 4
        %s148 = scalar_lea.vmem %s0, %s147
        %p149 = pneg %p49
        %p150 = pneg %p46
        %p151 = scmp.lt.s32.totalorder %s20, 0
        %s152 = scalar_select %p151, %s20, 0
        %s153 = smul.addr %s152, 4
        %s154 = scalar_lea.vmem %s1, %s153
        %p155 = pneg %p75
        %p156 = pneg %p72
        %p157 = pneg %p103
        %p158 = pneg %p100
        %s159 = sand.u32 %s90, 1
        %s160 = scalar_lea.sflag [#allocation3], %s159
        %s161 = sand.u32 %s90, 1
        %s162 = smul.addr %s161, 56
        %s163 = scalar_lea.vmem [#allocation2], %s162
        %p164 = scmp.lt.s32.totalorder %s21, 1
        %s165 = scalar_select %p164, %s21, 1
        %s166 = smul.addr %s165, 8
        %s167 = smul.addr %s166, 4
        %s168 = scalar_lea.vmem %s0, %s167
        %p169 = scmp.lt.s32.totalorder %s20, 0
        %s170 = scalar_select %p169, %s20, 0
        %s171 = smul.addr %s170, 4
        %s172 = scalar_lea.vmem %s1, %s171
        %v174 = vld [vmem:[%s168] sm:$0xf]
        %v175 = vld [vmem:[%s168 + $0x4] sm:$0xf]
        %v176 = vld [vmem:[%s168 + $0x8] sm:$0xf]
        %v177 = vld [vmem:[%s168 + $0xc] sm:$0xf]
        %v178 = vld [vmem:[%s168 + $0x10] sm:$0xf]
        %v179 = vld [vmem:[%s168 + $0x14] sm:$0xf]
        %v180 = vld [vmem:[%s168 + $0x18] sm:$0xf]
        %v181 = vld [vmem:[%s172] sm:$0xf]
        %v182 = vld [vmem:[%s172 + $0x4] sm:$0xf]
        %v183 = vld [vmem:[%s172 + $0x8] sm:$0xf]
        %v184 = vld [vmem:[%s168 + $0x1c] sm:$0xf]
        %s185 = scalar_lea.vmem %s172, 12
        %v186 = vld [vmem:[%s185] sm:$0xf]
        %v187 = vld [vmem:[%s185 + $0x4] sm:$0xf]
        %v188 = vld [vmem:[%s185 + $0x8] sm:$0xf]
        %v196 = vunpack.c.l.b16 %v175
        %v197 = vunpack.c.l.b16 %v176
        %v198 = vunpack.c.l.b16 %v177
        %v199 = vunpack.c.l.b16 %v178
        %v200 = vunpack.c.l.b16 %v179
        %v201 = vunpack.c.l.b16 %v180
        %v202 = vunpack.c.l.b16 %v184
        %v203 = vpack.c.b16 %v197, %v196
        %v204 = vpack.c.b16 %v199, %v198
        %v205 = vpack.c.b16 %v201, %v200
        %v206 = vpack.c.b16 %v202, %v202
        %v210 = vunpack.c.l.b16 %v186
        %v211 = vunpack.c.l.b16 %v187
        %v212 = vunpack.c.l.b16 %v188
        %v213 = vpack.c.b16 %v211, %v210
        %v214 = vpack.c.b16 %v212, %v212
        %vm216 = vcmask 195584
        %v218 = vsel %vm216, %v203, 0
        %v221 = vsel %vm216, %v204, 0
        %v224 = vsel %vm216, %v205, 0
        %v227 = vsel %vm216, %v206, 0
        %vm229 = vcmask 1043456
        %v231 = vsel %vm229, %v214, 0
        %233 = vmatprep.subr.bf16.mxu0 0
        %234 = vmatpush1.bf16.msra.mxu0 %v213
        %235 = vmatprep.subr.bf16.mxu0 0
        %236 = vmatpush1.bf16.msra.mxu0 %v231
        %237 = vmatprep.subr.bf16.mxu0 0
        %238 = vmatpush1.bf16.msra.mxu0 0
        %239 = vmatprep.subr.bf16.mxu0 0
        %240 = vmatpush1.bf16.msra.mxu0 0
        %241 = vmatprep.subr.bf16.mxu0 0
        %242 = vmatpush1.bf16.msra.mxu0 0
        %243 = vmatprep.subr.bf16.mxu0 0
        %244 = vmatpush1.bf16.msra.mxu0 0
        %245 = vmatprep.subr.bf16.mxu0 0
        %246 = vmatpush1.bf16.msra.mxu0 0
        %247 = vmatprep.subr.bf16.mxu0 0
        %248 = vmatpush1.bf16.msra.mxu0 0
        %249 = vmatprep.subr.bf16.mxu0 0
        %250 = vmatpush1.bf16.msra.mxu0 0
        %251 = vmatprep.subr.bf16.mxu0 0
        %252 = vmatpush1.bf16.msra.mxu0 0
        %253 = vmatprep.subr.bf16.mxu0 0
        %254 = vmatpush1.bf16.msra.mxu0 0
        %255 = vmatprep.subr.bf16.mxu0 0
        %256 = vmatpush1.bf16.msra.mxu0 0
        %257 = vmatprep.subr.bf16.mxu0 0
        %258 = vmatpush1.bf16.msra.mxu0 0
        %259 = vmatprep.subr.bf16.mxu0 0
        %260 = vmatpush1.bf16.msra.mxu0 0
        %261 = vmatprep.subr.bf16.mxu0 0
        %262 = vmatpush1.bf16.msra.mxu0 0
        %263 = vmatprep.subr.bf16.mxu0 0
        %264 = vmatpush1.bf16.msra.mxu0 0
        %265 = vmatprep.mubr.bf16.mxu0 0
        %266 = vmatmul.mubr.bf16.gmra.mrb[0].mxu0 %v218
        %v267 = vpop.f32.mrb[0].mxu0
        %v268 = vadd.f32 0.0, %v267
        %v269 = vpop.f32.mrb[0].mxu0
        %v270 = vpop.f32.mrb[0].mxu0
        %v271 = vadd.f32 0.0, %v270
        %v272 = vpop.f32.mrb[0].mxu0
        %273 = vmatprep.mubr.bf16.mxu0 0
        %274 = vmatmul.mubr.bf16.gmra.mrb[0].mxu0 %v221
        %v275 = vpop.f32.mrb[0].mxu0
        %v276 = vadd.f32 0.0, %v275
        %v277 = vpop.f32.mrb[0].mxu0
        %v278 = vpop.f32.mrb[0].mxu0
        %v279 = vadd.f32 0.0, %v278
        %v280 = vpop.f32.mrb[0].mxu0
        %281 = vmatprep.mubr.bf16.mxu0 0
        %282 = vmatmul.mubr.bf16.gmra.mrb[0].mxu0 %v224
        %v283 = vpop.f32.mrb[0].mxu0
        %v284 = vadd.f32 0.0, %v283
        %v285 = vpop.f32.mrb[0].mxu0
        %v286 = vpop.f32.mrb[0].mxu0
        %v287 = vadd.f32 0.0, %v286
        %v288 = vpop.f32.mrb[0].mxu0
        %289 = vmatprep.mubr.bf16.mxu0 0
        %290 = vmatmul.mubr.bf16.gmra.mrb[0].mxu0 %v227
        %v291 = vpop.f32.mrb[0].mxu0
        %v292 = vadd.f32 0.0, %v291
        %v293 = vpop.f32.mrb[0].mxu0
        %v294 = vpop.f32.mrb[0].mxu0
        %v295 = vpop.f32.mrb[0].mxu0
        %296 = vdwg.mxu0
        %v298 = vunpack.c.l.b16 %v174
        %v299 = vpack.c.b16 %v196, %v298
        %v300 = vpack.c.b16 %v198, %v197
        %v301 = vpack.c.b16 %v200, %v199
        %v302 = vpack.c.b16 %v201, %v201
        %v306 = vunpack.c.l.b16 %v181
        %v307 = vunpack.c.l.b16 %v182
        %v308 = vunpack.c.l.b16 %v183
        %v309 = vpack.c.b16 %v307, %v306
        %v310 = vpack.c.b16 %v308, %v308
        %v313 = vsel %vm216, %v299, 0
        %v316 = vsel %vm216, %v300, 0
        %v319 = vsel %vm216, %v301, 0
        %v322 = vsel %vm216, %v302, 0
        %v325 = vsel %vm229, %v310, 0
        %327 = vmatprep.subr.bf16.mxu0 0
        %328 = vmatpush1.bf16.msra.mxu0 %v309
        %329 = vmatprep.subr.bf16.mxu0 0
        %330 = vmatpush1.bf16.msra.mxu0 %v325
        %331 = vmatprep.subr.bf16.mxu0 0
        %332 = vmatpush1.bf16.msra.mxu0 0
        %333 = vmatprep.subr.bf16.mxu0 0
        %334 = vmatpush1.bf16.msra.mxu0 0
        %335 = vmatprep.subr.bf16.mxu0 0
        %336 = vmatpush1.bf16.msra.mxu0 0
        %337 = vmatprep.subr.bf16.mxu0 0
        %338 = vmatpush1.bf16.msra.mxu0 0
        %339 = vmatprep.subr.bf16.mxu0 0
        %340 = vmatpush1.bf16.msra.mxu0 0
        %341 = vmatprep.subr.bf16.mxu0 0
        %342 = vmatpush1.bf16.msra.mxu0 0
        %343 = vmatprep.subr.bf16.mxu0 0
        %344 = vmatpush1.bf16.msra.mxu0 0
        %345 = vmatprep.subr.bf16.mxu0 0
        %346 = vmatpush1.bf16.msra.mxu0 0
        %347 = vmatprep.subr.bf16.mxu0 0
        %348 = vmatpush1.bf16.msra.mxu0 0
        %349 = vmatprep.subr.bf16.mxu0 0
        %350 = vmatpush1.bf16.msra.mxu0 0
        %351 = vmatprep.subr.bf16.mxu0 0
        %352 = vmatpush1.bf16.msra.mxu0 0
        %353 = vmatprep.subr.bf16.mxu0 0
        %354 = vmatpush1.bf16.msra.mxu0 0
        %355 = vmatprep.subr.bf16.mxu0 0
        %356 = vmatpush1.bf16.msra.mxu0 0
        %357 = vmatprep.subr.bf16.mxu0 0
        %358 = vmatpush1.bf16.msra.mxu0 0
        %359 = vmatprep.mubr.bf16.mxu0 0
        %360 = vmatmul.mubr.bf16.gmra.mrb[0].mxu0 %v313
        %v361 = vpop.f32.mrb[0].mxu0
        %v362 = vadd.f32 %v268, %v361
        %v363 = vpop.f32.mrb[0].mxu0
        %v364 = vpop.f32.mrb[0].mxu0
        %v365 = vadd.f32 %v271, %v364
        %v366 = vpop.f32.mrb[0].mxu0
        %367 = vmatprep.mubr.bf16.mxu0 0
        %368 = vmatmul.mubr.bf16.gmra.mrb[0].mxu0 %v316
        %v369 = vpop.f32.mrb[0].mxu0
        %v370 = vadd.f32 %v276, %v369
        %v371 = vpop.f32.mrb[0].mxu0
        %v372 = vpop.f32.mrb[0].mxu0
        %v373 = vadd.f32 %v279, %v372
        %v374 = vpop.f32.mrb[0].mxu0
        %375 = vmatprep.mubr.bf16.mxu0 0
        %376 = vmatmul.mubr.bf16.gmra.mrb[0].mxu0 %v319
        %v377 = vpop.f32.mrb[0].mxu0
        %v378 = vadd.f32 %v284, %v377
        %v379 = vpop.f32.mrb[0].mxu0
        %v380 = vpop.f32.mrb[0].mxu0
        %v381 = vadd.f32 %v287, %v380
        %v382 = vpop.f32.mrb[0].mxu0
        %383 = vmatprep.mubr.bf16.mxu0 0
        %384 = vmatmul.mubr.bf16.gmra.mrb[0].mxu0 %v322
        %v385 = vpop.f32.mrb[0].mxu0
        %v386 = vadd.f32 %v292, %v385
        %v387 = vpop.f32.mrb[0].mxu0
        %v388 = vpop.f32.mrb[0].mxu0
        %v389 = vpop.f32.mrb[0].mxu0
        %390 = vdwg.mxu0
        %391 = vst [vmem:[%s163] sm:$0xff] %v362
        %392 = vst [vmem:[%s163 + $0x8] sm:$0xff] %v365
        %393 = vst [vmem:[%s163 + $0x10] sm:$0xff] %v370
        %394 = vst [vmem:[%s163 + $0x18] sm:$0xff] %v373
        %395 = vst [vmem:[%s163 + $0x20] sm:$0xff] %v378
        %396 = vst [vmem:[%s163 + $0x28] sm:$0xff] %v381
        %397 = vst [vmem:[%s163 + $0x30] sm:$0xff] %v386
        %s398 = sand.u32 %s90, 1
        %s399 = scalar_lea.sflag [#allocation3], %s398
        %s400 = sand.u32 %s90, 1
        %s401 = smul.addr %s400, 56
        %s402 = scalar_lea.vmem [#allocation2], %s401
        // Predicated region
        $region29: #{tpu_custom_call.1} parent=27 // pred_check
          %p403 = pneg %p100
        $region30: #{tpu_custom_call.1} parent=27 // pred_check_branch
          %405 = sbr.rel (%p403) target = $region32
        $region31: #{tpu_custom_call.1} parent=27 // pred_region
          %s407 = ssub.s32 896, 896
          %408 = vsyncadd %s399, %s407
          %s409 = smul.addr %s21, 7
          %s410 = sadd.s32 %s20, %s409
          %s411 = smul.addr %s410, 128
          %s412 = scalar_lea.hbm %s2, %s411
          %s413 = sshll.u32 %s402, 4
          %s414 = int_to_ptr.vmem [resolvable:$true] %s413
          %419 = dma.vmem_to_hbm [thread:$0]  %s414, 896, %s412, %s399, 128, 128, 8
        $region32: #{tpu_custom_call.1} parent=27 // pred_fallthru
          _
      $region28: #{tpu_custom_call.1} parent=5 // pred_fallthru
        _
      %p420 = scmp.le.s32.totalorder 2, %s11
      // Predicated region
      $region33: #{tpu_custom_call.1} parent=5 // pred_check
        %p421 = pneg %p420
      $region34: #{tpu_custom_call.1} parent=5 // pred_check_branch
        %423 = sbr.rel (%p421) target = $region36
      $region35: #{tpu_custom_call.1} parent=5 // pred_region
        %s424 = ssub.s32 %s11, 2
        // Predicated region
        $region37: #{tpu_custom_call.1} parent=35 // pred_check
          %p425 = pneg %p106
        $region38: #{tpu_custom_call.1} parent=35 // pred_check_branch
          %427 = sbr.rel (%p425) target = $region40
        $region39: #{tpu_custom_call.1} parent=35 // pred_region
          %s428 = sand.u32 %s91, 1
          %s429 = scalar_lea.sflag [#allocation3], %s428
          %s430 = sand.u32 %s91, 1
          %s431 = smul.addr %s430, 56
          %s432 = scalar_lea.vmem [#allocation2], %s431
          %433 = dma.done %s429, 896
        $region40: #{tpu_custom_call.1} parent=35 // pred_fallthru
          _
      $region36: #{tpu_custom_call.1} parent=5 // pred_fallthru
        _
    $region6: #{tpu_custom_call.1} parent=1 // loop_footer
      %s15 = sadd.s32 1, %s11
    $region7: #{tpu_custom_call.1} parent=1 // loop_footer_branch
      %10 = sbr.rel target = $region3
    $region8: #{tpu_custom_call.1} parent=1 // loop_exit
      _
    %434 = vsyncpa [#allocation3], 1
    %s435 = scalar_lea.sflag [#allocation3], 1
    %436 = vsyncpa %s435, 1

</llo_original>
